<compile_context>
chip_gen: v5e
topology: v5e:2x2
jax: 0.10.0
libtpu: 0.0.40
codegen_flags: <defaults>
</compile_context>

<pallas_src>
import jax
import jax.numpy as jnp
from jax import lax
from jax.experimental import pallas as pl

HIDDEN_S = 32              # hidden_s in the PyTorch module
OUTPUT_S = 16              # output_s in the PyTorch module
GATE_DIM = 4 * HIDDEN_S    # i,f,g,o gates -> 128 = one full lane width
PACK_ROWS = 3 * HIDDEN_S + 2
NEG_BIG = -1e30

assert GATE_DIM == 128, "packing scheme assumes 4 * hidden_s == 128"
assert OUTPUT_S <= HIDDEN_S


def decoder_kernel(xs_ref, hc0_ref, p_ref, out_ref):
    """xs_ref: (T, H); hc0_ref: (2, H); p_ref: (3H+2, 128); out_ref: (T, 128)."""
    H = HIDDEN_S
    T = xs_ref.shape[0]

    # Weights / biases stay resident in VMEM for the whole decode.
    w_cat = p_ref[0:2 * H, :]                    # (2H, 4H)  fused [W_ih; W_hh]
    w_out = p_ref[2 * H:3 * H, :]                # (H, 128)  zero-padded cols >= O
    b_gate = p_ref[3 * H:3 * H + 1, :]           # (1, 4H)   b_ih + b_hh
    b_out = p_ref[3 * H + 1:3 * H + 2, :]        # (1, 128)  -1e30 in padded cols
    pad_z = jnp.zeros((1, H), jnp.float32)

    def step(t, carry):
        h, c = carry
        x = xs_ref[pl.ds(t, 1), :]                               # (1, H)

        # Single fused gate matmul: [x, h] @ [W_ih; W_hh] + b    -> (1, 4H)
        xh = jnp.concatenate([x, h], axis=1)                     # (1, 2H)
        gates = jnp.dot(xh, w_cat, preferred_element_type=jnp.float32) + b_gate

        # Full-vreg activations; sigmoid via tanh identity (EUP, no divide).
        sig = 0.5 * (jnp.tanh(0.5 * gates) + 1.0)
        th = jnp.tanh(gates)

        i_g = sig[:, 0 * H:1 * H]
        f_g = sig[:, 1 * H:2 * H]
        g_g = th[:, 2 * H:3 * H]
        o_g = sig[:, 3 * H:4 * H]

        c1 = f_g * c + i_g * g_g
        h1 = o_g * jnp.tanh(c1)

        # Linear + log_softmax over the 128-lane padded logits (pad lanes ~ -1e30).
        logits = jnp.dot(h1, w_out, preferred_element_type=jnp.float32) + b_out
        m = jnp.max(logits, axis=1, keepdims=True)
        shifted = logits - m
        lse = jnp.log(jnp.sum(jnp.exp(shifted), axis=1, keepdims=True))
        logp = shifted - lse                                     # (1, 128)

        # Lane-dense packed output row: [logp(+pad) | h1 | c1 | 0]
        row = jnp.concatenate([logp[:, 0:H], h1, c1, pad_z], axis=1)
        out_ref[pl.ds(t, 1), :] = row
        return (h1, c1)

    h0 = hc0_ref[0:1, :]
    c0 = hc0_ref[1:2, :]
    lax.fori_loop(0, T, step, (h0, c0), unroll=(T <= 16))


def pack_params(p):
    """Pack PyTorch-layout params into one (3H+2, 128) f32 array (done once)."""
    H, O = HIDDEN_S, OUTPUT_S
    w_cat = jnp.concatenate([p["w_ih"].T, p["w_hh"].T], axis=0)            # (2H, 4H)
    w_out_pad = jnp.zeros((H, GATE_DIM), jnp.float32).at[:, :O].set(p["w_out"].T)
    b_gate = (p["b_ih"] + p["b_hh"]).reshape(1, 4 * H)
    b_out_pad = jnp.full((1, GATE_DIM), NEG_BIG, jnp.float32).at[0, :O].set(p["b_out"])
    return jnp.concatenate([w_cat, w_out_pad, b_gate, b_out_pad],
                           axis=0).astype(jnp.float32)                      # (98, 128)


def decoder_decode(xs, packed_params, hidden=None):
    """Run T decoder steps in ONE kernel launch.

    xs: (T, H) embedded inputs, one per step.
    Returns (log_probs (T, O), (h_n (1,1,H), c_n (1,1,H))) — step t equals the
    PyTorch forward applied to xs[t] with the hidden state fed back.
    """
    H, O = HIDDEN_S, OUTPUT_S
    xs = xs.reshape(-1, H).astype(jnp.float32)
    T = xs.shape[0]

    if hidden is None:
        hc0 = jnp.zeros((2, H), jnp.float32)
    else:
        hc0 = jnp.concatenate(
            [hidden[0].reshape(1, H), hidden[1].reshape(1, H)], axis=0
        ).astype(jnp.float32)

    out = pl.pallas_call(
        decoder_kernel,
        out_shape=jax.ShapeDtypeStruct((T, GATE_DIM), jnp.float32),
        grid=(),
        in_specs=[
            pl.BlockSpec((T, H), lambda: (0, 0)),
            pl.BlockSpec((2, H), lambda: (0, 0)),
            pl.BlockSpec((PACK_ROWS, GATE_DIM), lambda: (0, 0)),
        ],
        out_specs=pl.BlockSpec((T, GATE_DIM), lambda: (0, 0)),
    )(xs, hc0, packed_params)

    log_probs = out[:, :O]
    h_n = out[T - 1, H:2 * H].reshape(1, 1, H)
    c_n = out[T - 1, 2 * H:3 * H].reshape(1, 1, H)
    return log_probs, (h_n, c_n)


def decoder_forward(embedded_seq, packed_params, hidden=None):
    """Exact PyTorch Decoder.forward semantics (single step)."""
    log_probs, hidden_out = decoder_decode(
        embedded_seq.reshape(1, HIDDEN_S), packed_params, hidden)
    return log_probs[0], hidden_out


def init_params(key):
    """Deterministic synthetic params in PyTorch layout, uniform(-1/sqrt(H), 1/sqrt(H))."""
    H, O = HIDDEN_S, OUTPUT_S
    k = 1.0 / jnp.sqrt(jnp.float32(H))
    ks = jax.random.split(key, 6)
    return dict(
        w_ih=jax.random.uniform(ks[0], (4 * H, H), jnp.float32, -k, k),
        w_hh=jax.random.uniform(ks[1], (4 * H, H), jnp.float32, -k, k),
        b_ih=jax.random.uniform(ks[2], (4 * H,), jnp.float32, -k, k),
        b_hh=jax.random.uniform(ks[3], (4 * H,), jnp.float32, -k, k),
        w_out=jax.random.uniform(ks[4], (O, H), jnp.float32, -k, k),
        b_out=jax.random.uniform(ks[5], (O,), jnp.float32, -k, k),
    )


def _reference_decode(xs, p, hidden=None):
    """Pure-JAX reference: the PyTorch forward applied sequentially to xs."""
    H = HIDDEN_S
    if hidden is None:
        h = jnp.zeros((1, H), jnp.float32)
        c = jnp.zeros((1, H), jnp.float32)
    else:
        h = hidden[0].reshape(1, H).astype(jnp.float32)
        c = hidden[1].reshape(1, H).astype(jnp.float32)
    logps = []
    for t in range(xs.shape[0]):
        x = xs[t:t + 1].astype(jnp.float32)
        gates = x @ p["w_ih"].T + h @ p["w_hh"].T + p["b_ih"] + p["b_hh"]
        i = jax.nn.sigmoid(gates[:, :H])
        f = jax.nn.sigmoid(gates[:, H:2 * H])
        g = jnp.tanh(gates[:, 2 * H:3 * H])
        o = jax.nn.sigmoid(gates[:, 3 * H:])
        c = f * c + i * g
        h = o * jnp.tanh(c)
        logits = h @ p["w_out"].T + p["b_out"]
        logps.append(jax.nn.log_softmax(logits, axis=1)[0])
    return jnp.stack(logps), h, c


if __name__ == "__main__":
    key = jax.random.PRNGKey(0)
    k_param, k_x1, k_xs, k_h = jax.random.split(key, 4)

    params = init_params(k_param)
    packed = pack_params(params)

    # --- single-step forward: exact PyTorch Decoder.forward semantics ---
    embedded_seq = jax.random.normal(k_x1, (HIDDEN_S,), jnp.float32)
    logp1, (h1, c1) = decoder_forward(embedded_seq, packed, hidden=None)
    jax.block_until_ready((logp1, h1, c1))

    ref_lp, ref_h, ref_c = _reference_decode(embedded_seq.reshape(1, HIDDEN_S), params)
    assert logp1.shape == (OUTPUT_S,)
    assert h1.shape == (1, 1, HIDDEN_S) and c1.shape == (1, 1, HIDDEN_S)
    assert jnp.allclose(logp1, ref_lp[0], atol=1e-5)
    assert jnp.allclose(h1.reshape(1, HIDDEN_S), ref_h, atol=1e-5)
    assert jnp.allclose(c1.reshape(1, HIDDEN_S), ref_c, atol=1e-5)

    # --- multi-step decode: 8 steps fused into one kernel launch ---
    T = 8
    xs = jax.random.normal(k_xs, (T, HIDDEN_S), jnp.float32)
    h_init = 0.1 * jax.random.normal(k_h, (1, 1, HIDDEN_S), jnp.float32)
    c_init = 0.1 * jax.random.normal(jax.random.fold_in(k_h, 1), (1, 1, HIDDEN_S),
                                     jnp.float32)
    logps, (h_n, c_n) = decoder_decode(xs, packed, hidden=(h_init, c_init))
    jax.block_until_ready((logps, h_n, c_n))

    ref_lps, ref_hn, ref_cn = _reference_decode(xs, params, hidden=(h_init, c_init))
    assert logps.shape == (T, OUTPUT_S)
    assert jnp.allclose(logps, ref_lps, atol=1e-4)
    assert jnp.allclose(h_n.reshape(1, HIDDEN_S), ref_hn, atol=1e-4)
    assert jnp.allclose(c_n.reshape(1, HIDDEN_S), ref_cn, atol=1e-4)

    print("KERNEL_OK")
</pallas_src>

<mosaic_0001>
module attributes {stable_mosaic.version = 11 : i64} {
  func.func @decoder_kernel(%arg0: memref<1x32xf32, #tpu.memory_space<vmem>>, %arg1: memref<2x32xf32, #tpu.memory_space<vmem>>, %arg2: memref<98x128xf32, #tpu.memory_space<vmem>>, %arg3: memref<1x128xf32, #tpu.memory_space<vmem>>) attributes {dimension_semantics = [], scalar_prefetch = 0 : i64, scratch_operands = 0 : i64, tpu.core_type = #tpu.core_type<tc>} {
    %c0 = arith.constant 0 : index
    %c0_0 = arith.constant 0 : index
    %0 = vector.load %arg2[%c0, %c0_0] : memref<98x128xf32, #tpu.memory_space<vmem>>, vector<64x128xf32>
    %c64 = arith.constant 64 : index
    %c0_1 = arith.constant 0 : index
    %1 = vector.load %arg2[%c64, %c0_1] : memref<98x128xf32, #tpu.memory_space<vmem>>, vector<32x128xf32>
    %c96 = arith.constant 96 : index
    %c0_2 = arith.constant 0 : index
    %2 = vector.load %arg2[%c96, %c0_2] : memref<98x128xf32, #tpu.memory_space<vmem>>, vector<1x128xf32>
    %c97 = arith.constant 97 : index
    %c0_3 = arith.constant 0 : index
    %3 = vector.load %arg2[%c97, %c0_3] : memref<98x128xf32, #tpu.memory_space<vmem>>, vector<1x128xf32>
    %cst = arith.constant 0.000000e+00 : f32
    %4 = vector.broadcast %cst : f32 to vector<1x32xf32>
    %c0_4 = arith.constant 0 : index
    %c0_5 = arith.constant 0 : index
    %5 = vector.load %arg1[%c0_4, %c0_5] : memref<2x32xf32, #tpu.memory_space<vmem>>, vector<1x32xf32>
    %c1 = arith.constant 1 : index
    %c0_6 = arith.constant 0 : index
    %6 = vector.load %arg1[%c1, %c0_6] : memref<2x32xf32, #tpu.memory_space<vmem>>, vector<1x32xf32>
    %c0_i32 = arith.constant 0 : i32
    %7 = arith.index_cast %c0_i32 : i32 to index
    %c0_7 = arith.constant 0 : index
    %8 = vector.load %arg0[%7, %c0_7] : memref<1x32xf32, #tpu.memory_space<vmem>>, vector<1x32xf32>
    %9 = tpu.concatenate %8, %5 in 1 : vector<1x32xf32>, vector<1x32xf32> -> vector<1x64xf32>
    %cst_8 = arith.constant dense<0.000000e+00> : vector<1x128xf32>
    %10 = tpu.matmul %9, %0, %cst_8 {dimension_numbers = #tpu.dot_dimension_numbers<[1], [0], [0], [1], [0, 0, 1, 1], [], []>} : vector<1x64xf32>, vector<64x128xf32>, vector<1x128xf32> -> vector<1x128xf32>
    %11 = arith.addf %10, %2 : vector<1x128xf32>
    %cst_9 = arith.constant 5.000000e-01 : f32
    %12 = vector.broadcast %cst_9 : f32 to vector<1x128xf32>
    %13 = arith.mulf %12, %11 : vector<1x128xf32>
    %14 = math.tanh %13 : vector<1x128xf32>
    %cst_10 = arith.constant 1.000000e+00 : f32
    %15 = vector.broadcast %cst_10 : f32 to vector<1x128xf32>
    %16 = arith.addf %14, %15 : vector<1x128xf32>
    %cst_11 = arith.constant 5.000000e-01 : f32
    %17 = vector.broadcast %cst_11 : f32 to vector<1x128xf32>
    %18 = arith.mulf %17, %16 : vector<1x128xf32>
    %19 = math.tanh %11 : vector<1x128xf32>
    %20 = vector.extract_strided_slice %18 {offsets = [0, 0], sizes = [1, 32], strides = [1, 1]} : vector<1x128xf32> to vector<1x32xf32>
    %21 = vector.extract_strided_slice %18 {offsets = [0, 32], sizes = [1, 32], strides = [1, 1]} : vector<1x128xf32> to vector<1x32xf32>
    %22 = vector.extract_strided_slice %19 {offsets = [0, 64], sizes = [1, 32], strides = [1, 1]} : vector<1x128xf32> to vector<1x32xf32>
    %23 = vector.extract_strided_slice %18 {offsets = [0, 96], sizes = [1, 32], strides = [1, 1]} : vector<1x128xf32> to vector<1x32xf32>
    %24 = arith.mulf %21, %6 : vector<1x32xf32>
    %25 = arith.mulf %20, %22 : vector<1x32xf32>
    %26 = arith.addf %24, %25 : vector<1x32xf32>
    %27 = math.tanh %26 : vector<1x32xf32>
    %28 = arith.mulf %23, %27 : vector<1x32xf32>
    %cst_12 = arith.constant dense<0.000000e+00> : vector<1x128xf32>
    %29 = tpu.matmul %28, %1, %cst_12 {dimension_numbers = #tpu.dot_dimension_numbers<[1], [0], [0], [1], [0, 0, 1, 1], [], []>} : vector<1x32xf32>, vector<32x128xf32>, vector<1x128xf32> -> vector<1x128xf32>
    %30 = arith.addf %29, %3 : vector<1x128xf32>
    %cst_13 = arith.constant dense<0xFF800000> : vector<1xf32>
    %31 = vector.multi_reduction <maximumf>, %30, %cst_13 [1] : vector<1x128xf32> to vector<1xf32>
    %32 = vector.shape_cast %31 : vector<1xf32> to vector<1x1xf32>
    %33 = vector.broadcast %32 : vector<1x1xf32> to vector<1x128xf32>
    %34 = arith.subf %30, %33 : vector<1x128xf32>
    %35 = math.exp %34 : vector<1x128xf32>
    %cst_14 = arith.constant dense<0.000000e+00> : vector<1xf32>
    %36 = vector.multi_reduction <add>, %35, %cst_14 [1] : vector<1x128xf32> to vector<1xf32>
    %37 = vector.shape_cast %36 : vector<1xf32> to vector<1x1xf32>
    %38 = math.log %37 : vector<1x1xf32>
    %39 = vector.broadcast %38 : vector<1x1xf32> to vector<1x128xf32>
    %40 = arith.subf %34, %39 : vector<1x128xf32>
    %41 = vector.extract_strided_slice %40 {offsets = [0, 0], sizes = [1, 32], strides = [1, 1]} : vector<1x128xf32> to vector<1x32xf32>
    %42 = tpu.concatenate %41, %28, %26, %4 in 1 : vector<1x32xf32>, vector<1x32xf32>, vector<1x32xf32>, vector<1x32xf32> -> vector<1x128xf32>
    %43 = arith.index_cast %c0_i32 : i32 to index
    %c0_15 = arith.constant 0 : index
    %44 = vector.load %arg3[%43, %c0_15] : memref<1x128xf32, #tpu.memory_space<vmem>>, vector<1x128xf32>
    tpu.vector_store %arg3[%43, %c0_15], %42 {strides = array<i32>} : memref<1x128xf32, #tpu.memory_space<vmem>>, vector<1x128xf32>,
    %c1_i32 = arith.constant 1 : i32
    return
  }
}

</mosaic_0001>

<llo_original>
// kernel: tpu_custom_call.1
$region0: #{tpu_custom_call.1}
  #allocation0 [shape = 'u32[]', space=smem, size = 0x4, offset = 0x4, fixed_abs, tag = 'smem constant byte address 0x4 - core index']
  #allocation1 [shape = 'u32[72,128]{1,0:T(1,128)}', space=vmem, size = 0x9000, scoped, tag = 'internal scratch']
  %s0 = inlined_call_operand.hbm [shape: f32[1,32], index: 0, kind: input, shape index: {}]
  %s1 = inlined_call_operand.hbm [shape: f32[2,32], index: 1, kind: input, shape index: {}]
  %s2 = inlined_call_operand.hbm [shape: f32[98,128], index: 2, kind: input, shape index: {}]
  %s3 = inlined_call_operand.hbm [shape: f32[1,128], index: 3, kind: output, shape index: {}]
  %s4 = sld [smem:[#allocation0]]
  $region34: #{tpu_custom_call.1} parent=0
    _
  %s6 = ssub.s32 1, %s4
  %s7 = scalar_select 0, %s6, %s4
  $region1: #{tpu_custom_call.1} parent=0
    #allocation2 [shape = 'u8[512]{0}', space=vmem, size = 0x400, scoped, tag = 'input window, operand 0, single buffered']
    #allocation3 [shape = 's32[1]{0}', space=sflag, size = 0x4, scoped, tag = 'scoped memory for tpu_custom_call.1']
    #allocation4 [shape = 's32[1]{0}', space=sflag, size = 0x4, scoped, tag = 'scoped memory for tpu_custom_call.1']
    #allocation5 [shape = 'u8[1024]{0}', space=vmem, size = 0x400, scoped, tag = 'input window, operand 1, single buffered']
    #allocation6 [shape = 's32[1]{0}', space=sflag, size = 0x4, scoped, tag = 'scoped memory for tpu_custom_call.1']
    #allocation7 [shape = 'u8[53248]{0}', space=vmem, size = 0xd000, scoped, tag = 'input window, operand 2, single buffered']
    #allocation8 [shape = 'u8[512]{0}', space=vmem, size = 0x400, scoped, tag = 'output window, operand 0, single buffered']
    %8 = vsyncpa [#allocation3], 0
    %9 = vsyncpa [#allocation6], 0
    %10 = vsyncpa [#allocation4], 0
    // Predicated region
    $region2: #{tpu_custom_call.1} parent=1 // pred_check
      _
    $region3: #{tpu_custom_call.1} parent=1 // pred_check_branch
      %12 = sbr.rel (0) target = $region5
    $region4: #{tpu_custom_call.1} parent=1 // pred_region
      %14 = vsyncadd [#allocation3], 0
      %s16 = sshll.u32 %s0, 4
      %s17 = int_to_ptr.hbm [resolvable:$true] %s16
      %s18 = sshll.u32 [#allocation2], 4
      %s19 = int_to_ptr.vmem [resolvable:$true] %s18
      %21 = dma.hbm_to_vmem [thread:$0]  %s17, 16, %s19, [#allocation3]
    $region5: #{tpu_custom_call.1} parent=1 // pred_fallthru
      _
    // Predicated region
    $region6: #{tpu_custom_call.1} parent=1 // pred_check
      _
    $region7: #{tpu_custom_call.1} parent=1 // pred_check_branch
      %23 = sbr.rel (0) target = $region9
    $region8: #{tpu_custom_call.1} parent=1 // pred_region
      %25 = vsyncadd [#allocation6], 0
      %s27 = sshll.u32 %s1, 4
      %s28 = int_to_ptr.hbm [resolvable:$true] %s27
      %s29 = sshll.u32 [#allocation5], 4
      %s30 = int_to_ptr.vmem [resolvable:$true] %s29
      %32 = dma.hbm_to_vmem [thread:$0]  %s28, 32, %s30, [#allocation6]
    $region9: #{tpu_custom_call.1} parent=1 // pred_fallthru
      _
    // Predicated region
    $region10: #{tpu_custom_call.1} parent=1 // pred_check
      _
    $region11: #{tpu_custom_call.1} parent=1 // pred_check_branch
      %34 = sbr.rel (0) target = $region13
    $region12: #{tpu_custom_call.1} parent=1 // pred_region
      %36 = vsyncadd [#allocation6], 0
      %s37 = sshll.u32 %s2, 4
      %s38 = int_to_ptr.hbm [resolvable:$true] %s37
      %s39 = sshll.u32 [#allocation7], 4
      %s40 = int_to_ptr.vmem [resolvable:$true] %s39
      %45 = dma.hbm_to_vmem [thread:$0]  %s38, 1664, %s40, [#allocation6], 128, 128, 8
    $region13: #{tpu_custom_call.1} parent=1 // pred_fallthru
      _
    // Predicated region
    $region14: #{tpu_custom_call.1} parent=1 // pred_check
      _
    $region15: #{tpu_custom_call.1} parent=1 // pred_check_branch
      %47 = sbr.rel (0) target = $region17
    $region16: #{tpu_custom_call.1} parent=1 // pred_region
      %49 = dma.done [#allocation3], 16
    $region17: #{tpu_custom_call.1} parent=1 // pred_fallthru
      _
    // Predicated region
    $region18: #{tpu_custom_call.1} parent=1 // pred_check
      _
    $region19: #{tpu_custom_call.1} parent=1 // pred_check_branch
      %51 = sbr.rel (0) target = $region21
    $region20: #{tpu_custom_call.1} parent=1 // pred_region
      %53 = dma.done [#allocation6], 32
    $region21: #{tpu_custom_call.1} parent=1 // pred_fallthru
      _
    // Predicated region
    $region22: #{tpu_custom_call.1} parent=1 // pred_check
      _
    $region23: #{tpu_custom_call.1} parent=1 // pred_check_branch
      %55 = sbr.rel (0) target = $region25
    $region24: #{tpu_custom_call.1} parent=1 // pred_region
      %57 = dma.done [#allocation6], 1664
    $region25: #{tpu_custom_call.1} parent=1 // pred_fallthru
      _
    %v58 = vld [vmem:[#allocation7] sm:$0xff]
    %v59 = vld [vmem:[#allocation7 + $0x8] sm:$0xff]
    %v60 = vld [vmem:[#allocation7 + $0x10] sm:$0xff]
    %v61 = vld [vmem:[#allocation7 + $0x18] sm:$0xff]
    %v62 = vld [vmem:[#allocation7 + $0x20] sm:$0xff]
    %v63 = vld [vmem:[#allocation7 + $0x28] sm:$0xff]
    %v64 = vld [vmem:[#allocation7 + $0x30] sm:$0xff]
    %v65 = vld [vmem:[#allocation7 + $0x38] sm:$0xff]
    %v66 = vld [vmem:[#allocation7 + $0x40] sm:$0xff]
    %v67 = vld [vmem:[#allocation7 + $0x48] sm:$0xff]
    %v68 = vld [vmem:[#allocation7 + $0x50] sm:$0xff]
    %v69 = vld [vmem:[#allocation7 + $0x58] sm:$0xff]
    %v70 = vld [vmem:[#allocation7 + $0x60] sm:$0x1]
    %v71 = vld [vmem:[#allocation7 + $0x61] sm:$0x1]
    %v72 = vld [vmem:[#allocation5] sm:$0x1]
    %v73 = vld [vmem:[#allocation5 + $0x1] sm:$0x1]
    %v74 = vld [vmem:[#allocation2] sm:$0x1]
    %76 = vrot.lane.b32.xlu0 %v72, 32
    %v77 = vpop.permute.xlu0 %76
    %vm79 = vcmask 261120
    %v80 = vsel %vm79, %v74, %v77
    %vm81 = vcmask 523264
    %v83 = vsel %vm81, %v80, 0
    %85 = vmatpush.msra.mxu0 0.0
    %86 = vmatpush.msra.mxu0 0.0
    %87 = vmatpush.msra.mxu0 0.0
    %88 = vmatpush.msra.mxu0 0.0
    %89 = vmatpush.msra.mxu0 0.0
    %90 = vmatpush.msra.mxu0 0.0
    %91 = vmatpush.msra.mxu0 0.0
    %92 = vmatpush.msra.mxu0 0.0
    %93 = vmatpush.msra.mxu0 %v65
    %94 = vmatpush.msra.mxu0 %v64
    %95 = vmatpush.msra.mxu0 %v63
    %96 = vmatpush.msra.mxu0 %v62
    %97 = vmatpush.msra.mxu0 %v61
    %98 = vmatpush.msra.mxu0 %v60
    %99 = vmatpush.msra.mxu0 %v59
    %100 = vmatpush.msra.mxu0 %v58
    %101 = vmatmul.f32.gmra.mxu0 %v83
    %v102 = vpop.f32.mrf.mxu0
    %v103 = vadd.f32 %v70, %v102
    %104 = vdwg.mxu0
    %v105 = vmul.f32 %v103, 0.5
    %v106 = vtanh.pop %v105
    %v107 = vadd.f32 %v106, 1.0
    %v108 = vmul.f32 %v107, 0.5
    %v109 = vtanh.pop %v103
    %111 = vrot.lane.b32.xlu0 %v73, 32
    %v112 = vpop.permute.xlu0 %111
    %v114 = vmul.f32 %v108, %v112
    %116 = vrot.lane.b32.xlu0 %v109, 64
    %v117 = vpop.permute.xlu0 %116
    %v119 = vmul.f32 %v108, %v117
    %121 = vrot.lane.b32.xlu0 %v119, 32
    %v122 = vpop.permute.xlu0 %121
    %v124 = vadd.f32 %v114, %v122
    %v125 = vtanh.pop %v124
    %127 = vrot.lane.b32.xlu0 %v125, 64
    %v128 = vpop.permute.xlu0 %127
    %v130 = vmul.f32 %v108, %v128
    %132 = vrot.lane.b32.xlu0 %v130, 32
    %v133 = vpop.permute.xlu0 %132
    %v134 = vsel %vm79, %v133, 0
    %136 = vmatpush.msra.mxu0 0.0
    %137 = vmatpush.msra.mxu0 0.0
    %138 = vmatpush.msra.mxu0 0.0
    %139 = vmatpush.msra.mxu0 0.0
    %140 = vmatpush.msra.mxu0 0.0
    %141 = vmatpush.msra.mxu0 0.0
    %142 = vmatpush.msra.mxu0 0.0
    %143 = vmatpush.msra.mxu0 0.0
    %144 = vmatpush.msra.mxu0 0.0
    %145 = vmatpush.msra.mxu0 0.0
    %146 = vmatpush.msra.mxu0 0.0
    %147 = vmatpush.msra.mxu0 0.0
    %148 = vmatpush.msra.mxu0 %v69
    %149 = vmatpush.msra.mxu0 %v68
    %150 = vmatpush.msra.mxu0 %v67
    %151 = vmatpush.msra.mxu0 %v66
    %152 = vmatmul.f32.gmra.mxu0 %v134
    %v153 = vpop.f32.mrf.mxu0
    %v154 = vadd.f32 %v71, %v153
    %155 = vdwg.mxu0
    %vm156 = vcmask 1040384
    %v157 = vsel %vm156, %v154, -inf
    %158 = vmax.xlane.f32.xlu0 %v157
    %v159 = vpop.xlane.xlu0 %158
    %v160 = vsub.f32 %v154, %v159
    %v161 = vmul.f32 %v160, 1.442695
    %v162 = vpow.pop %v161
    %v163 = vsel %vm156, %v162, 0.0
    %164 = vadd.xlane.f32.xlu0 %v163
    %v165 = vpop.xlane.xlu0 %164
    %v166 = vlog2.pop %v165
    %v167 = vmul.f32 %v166, 0.6931472
    %v168 = vsub.f32 %v160, %v167
    %169 = vrot.lane.b32.xlu0 %v130, 64
    %v170 = vpop.permute.xlu0 %169
    %173 = vrot.lane.b32.xlu0 %v124, 32
    %v174 = vpop.permute.xlu0 %173
    %v176 = vsel %vm79, %v168, %v170
    %v177 = vsel %vm81, %v176, %v174
    %vm178 = vcmask 785408
    %v179 = vsel %vm178, %v177, 0.0
    %180 = vst [vmem:[#allocation8] sm:$0x1] %v179
    // Predicated region
    $region26: #{tpu_custom_call.1} parent=1 // pred_check
      _
    $region27: #{tpu_custom_call.1} parent=1 // pred_check_branch
      %182 = sbr.rel (0) target = $region29
    $region28: #{tpu_custom_call.1} parent=1 // pred_region
      %184 = vsyncadd [#allocation4], 0
      %s186 = sshll.u32 [#allocation8], 4
      %s187 = int_to_ptr.vmem [resolvable:$true] %s186
      %s188 = sshll.u32 %s3, 4
      %s189 = int_to_ptr.hbm [resolvable:$true] %s188
      %191 = dma.vmem_to_hbm [thread:$0]  %s187, 16, %s189, [#allocation4]
    $region29: #{tpu_custom_call.1} parent=1 // pred_fallthru
      _
    // Predicated region
    $region30: #{tpu_custom_call.1} parent=1 // pred_check
      _
    $region31: #{tpu_custom_call.1} parent=1 // pred_check_branch
      %193 = sbr.rel (0) target = $region33
    $region32: #{tpu_custom_call.1} parent=1 // pred_region
      %195 = dma.done [#allocation4], 16
    $region33: #{tpu_custom_call.1} parent=1 // pred_fallthru
      _
    %196 = vsyncpa [#allocation3], 1
    %197 = vsyncpa [#allocation6], 1
    %198 = vsyncpa [#allocation4], 1

</llo_original>
